<compile_context>
chip_gen: v6e
topology: v6e:2x2x1
jax: 0.10.0
libtpu: 0.0.40
codegen_flags: <defaults>
</compile_context>

<pallas_src>
import functools

import jax
import jax.numpy as jnp
from jax.experimental import pallas as pl
from jax.experimental.pallas import tpu as pltpu


def _rbf_kernel(x_ref, mean_ref, std_ref, out_ref):
    # x_ref:   (TM, D) VMEM tile of similarity scores
    # mean_ref/std_ref: (1,) SMEM scalars (RBF kernel parameters)
    # out_ref: (TM, 1) VMEM tile of pooled RBF features
    mean = mean_ref[0]
    std = std_ref[0]
    c = -0.5 / (std * std)              # scalar-unit math; no vector divide
    x = x_ref[...].astype(jnp.float32)  # compute in f32 (bf16 inputs OK, incl. v5e)
    diff = x - mean
    out_ref[...] = jnp.sum(jnp.exp(diff * diff * c), axis=-1, keepdims=True)


def _choose_tile_rows(R, D, itemsize):
    # ~8 MiB of double-buffered input tiles works on all of v5e/v6e/v7x and
    # keeps per-grid-step overhead (~0.35 us) negligible.
    budget_bytes = 8 * 1024 * 1024
    tile_rows = budget_bytes // (2 * D * itemsize)
    tile_rows = max(8, min(1024, (tile_rows // 8) * 8))
    # Never make the tile bigger than the (8-row rounded) problem itself.
    tile_rows = min(tile_rows, pl.cdiv(R, 8) * 8)
    return int(tile_rows)


@functools.partial(jax.jit, static_argnames=("tile_rows",))
def rbf_kernel_forward(similarity_matrix, mean, stddev, tile_rows=None):
    """Pallas implementation of RbfKernel.forward.

    similarity_matrix: (B, Q, D) float32 (or bf16)
    mean, stddev:      (1,) float32 parameter arrays
    returns:           (B, Q) float32
    """
    B, Q, D = similarity_matrix.shape
    R = B * Q
    x2d = similarity_matrix.reshape(R, D)
    itemsize = jnp.dtype(similarity_matrix.dtype).itemsize

    if tile_rows is None:
        tile_rows = _choose_tile_rows(R, D, itemsize)
    # NOTE: for extreme doc_len (a single 8-row stripe > ~8 MiB) a second,
    # "arbitrary" reduction grid axis over D with a VMEM accumulator would be
    # needed; typical KNRM doc lengths are far below that.

    # Ragged last block instead of padding: no extra HBM copy of the input.
    grid = (pl.cdiv(R, tile_rows),)

    cost = pl.CostEstimate(
        flops=3 * R * D,
        transcendentals=R * D,
        bytes_accessed=R * D * itemsize + R * 4,
    )

    out = pl.pallas_call(
        _rbf_kernel,
        out_shape=jax.ShapeDtypeStruct((R, 1), jnp.float32),
        grid_spec=pltpu.PrefetchScalarGridSpec(
            num_scalar_prefetch=0,
            grid=grid,
            in_specs=[
                pl.BlockSpec((tile_rows, D), lambda i: (i, 0)),
                pl.BlockSpec(memory_space=pltpu.MemorySpace.SMEM),
                pl.BlockSpec(memory_space=pltpu.MemorySpace.SMEM),
            ],
            out_specs=pl.BlockSpec((tile_rows, 1), lambda i: (i, 0)),
        ),
        compiler_params=pltpu.CompilerParams(
            dimension_semantics=("parallel",),
        ),
        cost_estimate=cost,
    )(x2d, mean, stddev)

    return out[:, 0].reshape(B, Q)


if __name__ == "__main__":
    # Deterministic parameter init (module stores scalar mean / stddev).
    initial_mean = 0.5
    initial_stddev = 0.1
    mean = jnp.array([initial_mean], dtype=jnp.float32)
    stddev = jnp.array([initial_stddev], dtype=jnp.float32)

    def reference(x):
        return jnp.exp(-0.5 * (x - mean[0]) ** 2 / (stddev[0] ** 2)).sum(-1)

    key = jax.random.PRNGKey(0)
    k1, k2 = jax.random.split(key)

    # Small example consistent with the forward: (batch, query_len, doc_len).
    B, Q, D = 2, 8, 128
    x = jax.random.uniform(k1, (B, Q, D), dtype=jnp.float32, minval=-1.0, maxval=1.0)
    result = jax.block_until_ready(rbf_kernel_forward(x, mean, stddev))
    ref = reference(x)
    assert result.shape == (B, Q), result.shape
    assert jnp.allclose(result, ref, rtol=1e-5, atol=1e-5), (
        float(jnp.max(jnp.abs(result - ref)))
    )

    # Second case exercising the no-pad / ragged last block path
    # (R = 15 rows with tile_rows = 8 -> 2 grid steps, last one partial).
    B2, Q2, D2 = 3, 5, 256
    x2 = jax.random.uniform(k2, (B2, Q2, D2), dtype=jnp.float32, minval=-1.0, maxval=1.0)
    result2 = jax.block_until_ready(rbf_kernel_forward(x2, mean, stddev, tile_rows=8))
    ref2 = reference(x2)
    assert result2.shape == (B2, Q2), result2.shape
    assert jnp.allclose(result2, ref2, rtol=1e-5, atol=1e-5), (
        float(jnp.max(jnp.abs(result2 - ref2)))
    )

    print("KERNEL_OK")
</pallas_src>

<mosaic_0001>
module attributes {stable_mosaic.version = 11 : i64} {
  func.func @_rbf_kernel(%arg0: i32, %arg1: memref<16x128xf32, #tpu.memory_space<vmem>>, %arg2: memref<1xf32, #tpu.memory_space<smem>>, %arg3: memref<1xf32, #tpu.memory_space<smem>>, %arg4: memref<16x1xf32, #tpu.memory_space<vmem>>) attributes {dimension_semantics = [#tpu.dimension_semantics<parallel>], iteration_bounds = array<i64: 1>, scalar_prefetch = 0 : i64, scratch_operands = 0 : i64, tpu.core_type = #tpu.core_type<tc>, window_params = [{transform_indices = @transform_0, window_bounds = array<i64: 16, 128>}, {transform_indices = @transform_1, window_bounds = array<i64: 1>}, {transform_indices = @transform_2, window_bounds = array<i64: 1>}, {transform_indices = @transform_3, window_bounds = array<i64: 16, 1>}]} {
    %c0 = arith.constant 0 : index
    %0 = memref.load %arg2[%c0] : memref<1xf32, #tpu.memory_space<smem>>
    %c0_0 = arith.constant 0 : index
    %1 = memref.load %arg3[%c0_0] : memref<1xf32, #tpu.memory_space<smem>>
    %2 = arith.mulf %1, %1 : f32
    %cst = arith.constant -5.000000e-01 : f32
    %3 = arith.divf %cst, %2 : f32
    %c0_1 = arith.constant 0 : index
    %c0_2 = arith.constant 0 : index
    %4 = vector.load %arg1[%c0_1, %c0_2] : memref<16x128xf32, #tpu.memory_space<vmem>>, vector<16x128xf32>
    %5 = vector.broadcast %0 : f32 to vector<16x128xf32>
    %6 = arith.subf %4, %5 : vector<16x128xf32>
    %7 = arith.mulf %6, %6 : vector<16x128xf32>
    %8 = vector.broadcast %3 : f32 to vector<16x128xf32>
    %9 = arith.mulf %7, %8 : vector<16x128xf32>
    %10 = math.exp %9 : vector<16x128xf32>
    %cst_3 = arith.constant dense<0.000000e+00> : vector<16xf32>
    %11 = vector.multi_reduction <add>, %10, %cst_3 [1] : vector<16x128xf32> to vector<16xf32>
    %12 = vector.shape_cast %11 : vector<16xf32> to vector<16x1xf32>
    %c0_4 = arith.constant 0 : index
    %c0_5 = arith.constant 0 : index
    %13 = vector.load %arg4[%c0_4, %c0_5] : memref<16x1xf32, #tpu.memory_space<vmem>>, vector<16x1xf32>
    tpu.vector_store %arg4[%c0_4, %c0_5], %12 {strides = array<i32>} : memref<16x1xf32, #tpu.memory_space<vmem>>, vector<16x1xf32>,
    return
  }
  func.func @transform_0(%arg0: i32) -> (i32, i32) {
    %c0_i32 = arith.constant 0 : i32
    %c0_i32_0 = arith.constant 0 : i32
    return %arg0, %c0_i32 : i32, i32
  }
  func.func @transform_1(%arg0: i32) -> i32 {
    %c0_i32 = arith.constant 0 : i32
    %c0_i32_0 = arith.constant 0 : i32
    return %c0_i32 : i32
  }
  func.func @transform_2(%arg0: i32) -> i32 {
    %c0_i32 = arith.constant 0 : i32
    %c0_i32_0 = arith.constant 0 : i32
    return %c0_i32 : i32
  }
  func.func @transform_3(%arg0: i32) -> (i32, i32) {
    %c0_i32 = arith.constant 0 : i32
    %c0_i32_0 = arith.constant 0 : i32
    return %arg0, %c0_i32 : i32, i32
  }
}

</mosaic_0001>

<llo_original>
// kernel: squeeze.1
$region0: #{squeeze.1}
  %s0 = inlined_call_operand.vmem [shape: f32[16], index: 0, kind: input, shape index: {}]
  %s1 = inlined_call_operand.hbm [shape: f32[2,8], index: 1, kind: output, shape index: {}]
  $region1: #{squeeze.1} parent=0
    #allocation0 [shape = 'u8[1024]{0}', space=vmem, size = 0x400, scoped, tag = 'operand span for operand 1']
    #allocation1 [shape = 's32[1]{0}', space=sflag, size = 0x4, scoped, tag = 'scoped memory for squeeze.1']
    #allocation2 [shape = 'u8[4096]{0}', space=vmem, size = 0x1000, scoped, tag = 'scoped mem for output reshape']
    #allocation3 [shape = 'u8[4096]{0}', space=vmem, size = 0x1000, scoped, tag = 'scoped mem for input reshape']
    %2 = vsyncpa [#allocation1], 0
    %s4 = sshll.u32 1, 1
    %s5 = ssub.s32 %s4, 1
    %v6 = vld [vmem:[%s0] sm:%s5]
    %7 = vst [vmem:[#allocation3] sm:%s5] %v6
    %v8 = vld [vmem:[#allocation3] sm:$0x1]
    %vm9 = vcmask 64512
    %10 = vst.msk [vmem:[#allocation2] sm:$0x1] %vm9, %v8
    %v11 = vld [vmem:[#allocation3] sm:$0x1]
    %12 = vrot.lane.b32.xlu0 %v11, 120
    %v13 = vpop.permute.xlu0 %12
    %vm14 = vcmask 64512
    %s15 = scalar_lea.vmem [#allocation2], 1
    %16 = vst.msk [vmem:[%s15] sm:$0x1] %vm14, %v13
    %s18 = sshll.u32 1, 2
    %s19 = ssub.s32 %s18, 1
    %v21 = vld [vmem:[#allocation2] sm:%s19]
    %s22 = sshll.u32 1, 2
    %s23 = ssub.s32 %s22, 1
    %24 = vst [vmem:[#allocation0] sm:%s23] %v21
    %s26 = ssub.s32 32, 32
    %27 = vsyncadd [#allocation1], %s26
    %s29 = sshll.u32 [#allocation0], 4
    %s30 = int_to_ptr.vmem [resolvable:$true] %s29
    %32 = dma.vmem_to_hbm [thread:$0]  %s30, 32, %s1, [#allocation1]
    %33 = dma.done [#allocation1], 32
    %34 = vsyncpa [#allocation1], 1

// kernel: rbf_kernel_forward.1
$region0: #{rbf_kernel_forward.1}
  #allocation0 [shape = 'u32[]', space=smem, size = 0x4, offset = 0x4, fixed_abs, tag = 'smem constant byte address 0x4 - core index']
  #allocation1 [shape = 'u32[144,128]{1,0:T(1,128)}', space=vmem, size = 0x12000, scoped, tag = 'internal scratch']
  #allocation2 [shape = 'f32[1]{0:T(128)S(6)}', space=smem, size = 0x200, scoped, tag = 'scoped memory for rbf_kernel_forward.1']
  #allocation3 [shape = 'f32[1]{0:T(128)S(6)}', space=smem, size = 0x200, scoped, tag = 'scoped memory for rbf_kernel_forward.1']
  %s0 = inlined_call_operand.hbm [shape: f32[16,128], index: 0, kind: input, shape index: {}]
  %s1 = inlined_call_operand.<no memory space> [shape: f32[1], index: 1, kind: input, shape index: {}]
  %s2 = inlined_call_operand.<no memory space> [shape: f32[1], index: 2, kind: input, shape index: {}]
  %s3 = inlined_call_operand.vmem [shape: f32[16,1], index: 3, kind: output, shape index: {}]
  %s4 = sld [smem:[#allocation0]]
  $region26: #{rbf_kernel_forward.1} parent=0
    _
  %s6 = ssub.s32 1, %s4
  %s7 = scalar_select 0, %s6, %s4
  %8 = sst [smem:[#allocation2]] %s1
  %9 = sst [smem:[#allocation3]] %s2
  $region1: #{rbf_kernel_forward.1} parent=0
    #allocation4 [shape = 'u8[8192]{0}', space=vmem, size = 0x2000, scoped, tag = 'input window, operand 0, single buffered']
    #allocation5 [shape = 's32[1]{0}', space=sflag, size = 0x4, scoped, tag = 'scoped memory for rbf_kernel_forward.1']
    %10 = vsyncpa [#allocation5], 0
    // Predicated region
    $region2: #{rbf_kernel_forward.1} parent=1 // pred_check
      _
    $region3: #{rbf_kernel_forward.1} parent=1 // pred_check_branch
      %12 = sbr.rel (0) target = $region5
    $region4: #{rbf_kernel_forward.1} parent=1 // pred_region
      %s14 = ssub.s32 256, 256
      %15 = vsyncadd [#allocation5], %s14
      %s16 = sshll.u32 [#allocation4], 4
      %s17 = int_to_ptr.vmem [resolvable:$true] %s16
      %22 = dma.hbm_to_vmem [thread:$0]  %s0, 256, %s17, [#allocation5], 128, 128, 8
    $region5: #{rbf_kernel_forward.1} parent=1 // pred_fallthru
      _
    // Predicated region
    $region6: #{rbf_kernel_forward.1} parent=1 // pred_check
      _
    $region7: #{rbf_kernel_forward.1} parent=1 // pred_check_branch
      %24 = sbr.rel (0) target = $region9
    $region8: #{rbf_kernel_forward.1} parent=1 // pred_region
      _
    $region9: #{rbf_kernel_forward.1} parent=1 // pred_fallthru
      _
    // Predicated region
    $region10: #{rbf_kernel_forward.1} parent=1 // pred_check
      _
    $region11: #{rbf_kernel_forward.1} parent=1 // pred_check_branch
      %26 = sbr.rel (0) target = $region13
    $region12: #{rbf_kernel_forward.1} parent=1 // pred_region
      _
    $region13: #{rbf_kernel_forward.1} parent=1 // pred_fallthru
      _
    // Predicated region
    $region14: #{rbf_kernel_forward.1} parent=1 // pred_check
      _
    $region15: #{rbf_kernel_forward.1} parent=1 // pred_check_branch
      %28 = sbr.rel (0) target = $region17
    $region16: #{rbf_kernel_forward.1} parent=1 // pred_region
      %29 = dma.done [#allocation5], 256
    $region17: #{rbf_kernel_forward.1} parent=1 // pred_fallthru
      _
    %s30 = sld [smem:[#allocation2]]
    %s31 = sld [smem:[#allocation3]]
    %s32 = smul.f32 %s31, %s31
    %v33 = vstv %s32
    %v34 = vrcp.pop %v33
    %s35 = vtos %v34
    %s36 = smul.f32 -0.5, %s35
    %v37 = vld [vmem:[#allocation4] sm:$0xff]
    %v38 = vld [vmem:[#allocation4 + $0x8] sm:$0xff]
    %v39 = vstv %s30
    %v40 = vsub.f32 %v37, %v39
    %v41 = vsub.f32 %v38, %v39
    %v42 = vmul.f32 %v40, %v40
    %v43 = vmul.f32 %v41, %v41
    %v44 = vstv %s36
    %v45 = vmul.f32 %v42, %v44
    %v46 = vmul.f32 %v43, %v44
    %v47 = vmul.f32 %v45, 1.442695
    %v48 = vpow.pop %v47
    %v49 = vmul.f32 %v46, 1.442695
    %v50 = vpow.pop %v49
    %51 = vadd.xlane.f32.xlu0 %v48
    %v52 = vpop.xlane.xlu0 %51
    %53 = vadd.xlane.f32.xlu0 %v50
    %v54 = vpop.xlane.xlu0 %53
    %vm55 = vcmask 7168
    %56 = vst.msk [vmem:[%s3] sm:$0xff] %vm55, %v52
    %57 = vst.msk [vmem:[%s3 + $0x8] sm:$0xff] %vm55, %v54
    // Predicated region
    $region18: #{rbf_kernel_forward.1} parent=1 // pred_check
      _
    $region19: #{rbf_kernel_forward.1} parent=1 // pred_check_branch
      %59 = sbr.rel (0) target = $region21
    $region20: #{rbf_kernel_forward.1} parent=1 // pred_region
      _
    $region21: #{rbf_kernel_forward.1} parent=1 // pred_fallthru
      _
    // Predicated region
    $region22: #{rbf_kernel_forward.1} parent=1 // pred_check
      _
    $region23: #{rbf_kernel_forward.1} parent=1 // pred_check_branch
      %61 = sbr.rel (0) target = $region25
    $region24: #{rbf_kernel_forward.1} parent=1 // pred_region
      _
    $region25: #{rbf_kernel_forward.1} parent=1 // pred_fallthru
      _
    %62 = vsyncpa [#allocation5], 1

</llo_original>
